<compile_context>
chip_gen: v6e
topology: v6e:2x2x1
jax: 0.10.0
libtpu: 0.0.40
codegen_flags: <defaults>
</compile_context>

<pallas_src>
import math

import jax
import jax.numpy as jnp
from jax.experimental import pallas as pl
from jax.experimental.pallas import tpu as pltpu


# ---------------------------------------------------------------------------
# Kernel: one (tm, tn) output tile of  y = x @ W + b, accumulated over K tiles.
#   x_ref: [tm, tk]   w_ref: [tk, tn]   b_ref: [1, tn] (f32)   o_ref: [tm, tn]
#   acc_ref: [tm, tn] f32 scratch (resident across the K grid axis)
# ---------------------------------------------------------------------------
def _lm_head_kernel(x_ref, w_ref, b_ref, o_ref, acc_ref):
    k = pl.program_id(2)

    @pl.when(k == 0)
    def _():
        acc_ref[...] = jnp.zeros_like(acc_ref)

    acc_ref[...] += jnp.dot(
        x_ref[...], w_ref[...], preferred_element_type=jnp.float32
    )

    @pl.when(k == pl.num_programs(2) - 1)
    def _():
        o_ref[...] = (acc_ref[...] + b_ref[...]).astype(o_ref.dtype)


# ---------------------------------------------------------------------------
# Helpers
# ---------------------------------------------------------------------------
def _round_up(x, m):
    return ((x + m - 1) // m) * m


def _pad_axis(a, axis, target):
    pad = target - a.shape[axis]
    if pad == 0:
        return a
    widths = [(0, 0)] * a.ndim
    widths[axis] = (0, pad)
    return jnp.pad(a, widths)


def _pick_tile(n, cap, align):
    """Largest tile <= cap (multiple of `align`) that divides round_up(n) tightly."""
    n_al = _round_up(n, align)
    if n_al <= cap:
        return n_al
    n_tiles = -(-n_al // cap)                     # ceil
    return _round_up(-(-n // n_tiles), align)     # ceil(n / n_tiles), aligned


# ---------------------------------------------------------------------------
# One-time parameter preparation (hoisted out of the per-call hot path):
#   - cast W to the streaming dtype (bf16)
#   - transpose to [model_dim, vocab] so the kernel uses the canonical
#     (tm,tk)x(tk,tn) contraction (no per-step transpose)
#   - pad vocab to a multiple of tn and model_dim to a multiple of tk
# ---------------------------------------------------------------------------
def prepare_params(weight, bias, *, compute_dtype=jnp.bfloat16,
                   tn_max=256, tk_max=512):
    V, D = weight.shape
    tn = _pick_tile(V, tn_max, 128)               # lane-dense vocab tile
    if D <= tk_max:
        tk, Dp = D, D                             # full-K block, no padding
    else:
        tk = tk_max                               # multiple of 128
        Dp = _round_up(D, tk)
    Vp = _round_up(V, tn)

    w_t = weight.T.astype(compute_dtype)          # [D, V]
    w_t = _pad_axis(_pad_axis(w_t, 0, Dp), 1, Vp)
    b_p = _pad_axis(bias.reshape(1, V).astype(jnp.float32), 1, Vp)

    meta = dict(V=V, D=D, Vp=Vp, Dp=Dp, tn=tn, tk=tk, compute_dtype=compute_dtype)
    return w_t, b_p, meta


# ---------------------------------------------------------------------------
# Forward: y = x @ W.T + b  (single fused pallas_call over the whole batch)
# ---------------------------------------------------------------------------
def decoder_output_handler(x, w_t, b_p, meta, *, tm_max=512, out_dtype=None):
    V, D, Vp, Dp = meta["V"], meta["D"], meta["Vp"], meta["Dp"]
    tn, tk, compute_dtype = meta["tn"], meta["tk"], meta["compute_dtype"]

    *lead, Dx = x.shape
    assert Dx == D, "model_dim mismatch between input and weight"
    out_dtype = out_dtype or x.dtype

    # Fold all leading (batch/seq) dims into the row axis.
    x2 = x.reshape(-1, D).astype(compute_dtype)
    M = x2.shape[0]
    tm = _pick_tile(M, tm_max, 8)
    Mp = _round_up(M, tm)
    x_p = _pad_axis(_pad_axis(x2, 0, Mp), 1, Dp)

    grid = (Mp // tm, Vp // tn, Dp // tk)

    in_bytes = jnp.dtype(compute_dtype).itemsize
    out_bytes = jnp.dtype(out_dtype).itemsize

    # VMEM plan: double-buffered input/output tiles + f32 accumulator.
    vmem_need = (2 * (tm * tk + tk * tn) * in_bytes
                 + 2 * tn * 4
                 + 2 * tm * tn * out_bytes
                 + tm * tn * 4)
    vmem_limit = int(min(128 * 2**20, max(32 * 2**20, 4 * vmem_need)))

    cost = pl.CostEstimate(
        flops=2 * M * V * D,
        transcendentals=0,
        bytes_accessed=int(Mp * Dp * in_bytes * (Vp // tn)      # x re-streamed per vocab tile
                           + Dp * Vp * in_bytes * (Mp // tm)    # W re-streamed per row tile
                           + Mp * Vp * out_bytes),
    )

    out = pl.pallas_call(
        _lm_head_kernel,
        out_shape=jax.ShapeDtypeStruct((Mp, Vp), out_dtype),
        grid=grid,
        in_specs=[
            pl.BlockSpec((tm, tk), lambda i, j, k: (i, k)),   # activations tile
            pl.BlockSpec((tk, tn), lambda i, j, k: (k, j)),   # weight tile [K, N]
            pl.BlockSpec((1, tn), lambda i, j, k: (0, j)),    # bias tile (f32)
        ],
        out_specs=pl.BlockSpec((tm, tn), lambda i, j, k: (i, j)),
        scratch_shapes=[pltpu.VMEM((tm, tn), jnp.float32)],
        compiler_params=pltpu.CompilerParams(
            dimension_semantics=("parallel", "parallel", "arbitrary"),
            vmem_limit_bytes=vmem_limit,
        ),
        cost_estimate=cost,
    )(x_p, w_t, b_p)

    if Mp != M or Vp != V:
        out = out[:M, :V]
    return out.reshape(*lead, V)


# ---------------------------------------------------------------------------
# Deterministic parameter construction (PyTorch nn.Linear default init)
# ---------------------------------------------------------------------------
def init_params(key, model_dim, vocab_size):
    kw, kb = jax.random.split(key)
    bound = 1.0 / math.sqrt(model_dim)
    w = jax.random.uniform(kw, (vocab_size, model_dim), jnp.float32, -bound, bound)
    b = jax.random.uniform(kb, (vocab_size,), jnp.float32, -bound, bound)
    return w, b


# ---------------------------------------------------------------------------
if __name__ == "__main__":
    # Small shapes consistent with the module: [batch, seq, model_dim] -> vocab.
    B, S = 2, 8
    model_dim = 32
    vocab_size = 256

    key = jax.random.PRNGKey(0)
    kx, kp = jax.random.split(key)
    x = jax.random.normal(kx, (B, S, model_dim), jnp.float32)
    weight, bias = init_params(kp, model_dim, vocab_size)

    # One-time prep (bf16 cast + transpose + padding), then the fused forward.
    w_t, b_p, meta = prepare_params(weight, bias)
    out = decoder_output_handler(x, w_t, b_p, meta)
    out = jax.block_until_ready(out)

    # Reference with the same bf16-representable operands, f32 accumulation.
    x_c = x.astype(jnp.bfloat16).astype(jnp.float32)
    w_c = weight.astype(jnp.bfloat16).astype(jnp.float32)
    ref = x_c @ w_c.T + bias

    assert out.shape == (B, S, vocab_size)
    assert jnp.allclose(out, ref, rtol=1e-3, atol=1e-3), "mismatch vs JAX reference"
    # Sanity: still close to the full-f32 PyTorch-equivalent forward.
    ref_f32 = x @ weight.T + bias
    assert jnp.allclose(out, ref_f32, rtol=5e-2, atol=5e-2), "bf16 path drifted"

    print("KERNEL_OK")
</pallas_src>

<mosaic_0001>
module attributes {stable_mosaic.version = 11 : i64} {
  func.func @_lm_head_kernel(%arg0: i32, %arg1: i32, %arg2: i32, %arg3: memref<16x32xbf16, #tpu.memory_space<vmem>>, %arg4: memref<32x256xbf16, #tpu.memory_space<vmem>>, %arg5: memref<1x256xf32, #tpu.memory_space<vmem>>, %arg6: memref<16x256xf32, #tpu.memory_space<vmem>>, %arg7: memref<16x256xf32, #tpu.memory_space<vmem>>) attributes {dimension_semantics = [#tpu.dimension_semantics<parallel>, #tpu.dimension_semantics<parallel>, #tpu.dimension_semantics<arbitrary>], iteration_bounds = array<i64: 1, 1, 1>, scalar_prefetch = 0 : i64, scratch_operands = 1 : i64, tpu.core_type = #tpu.core_type<tc>, window_params = [{transform_indices = @transform_0, window_bounds = array<i64: 16, 32>}, {transform_indices = @transform_1, window_bounds = array<i64: 32, 256>}, {transform_indices = @transform_2, window_bounds = array<i64: 1, 256>}, {transform_indices = @transform_3, window_bounds = array<i64: 16, 256>}]} {
    %c0_i32 = arith.constant 0 : i32
    %0 = arith.cmpi eq, %arg2, %c0_i32 : i32
    %1 = arith.extui %0 : i1 to i32
    %c0_i32_0 = arith.constant 0 : i32
    %2 = arith.cmpi ne, %1, %c0_i32_0 : i32
    scf.if %2 {
      %cst_10 = arith.constant 0.000000e+00 : f32
      %12 = vector.broadcast %cst_10 : f32 to vector<16x256xf32>
      %c0_11 = arith.constant 0 : index
      %c0_12 = arith.constant 0 : index
      %13 = vector.load %arg7[%c0_11, %c0_12] : memref<16x256xf32, #tpu.memory_space<vmem>>, vector<16x256xf32>
      tpu.vector_store %arg7[%c0_11, %c0_12], %12 {strides = array<i32>} : memref<16x256xf32, #tpu.memory_space<vmem>>, vector<16x256xf32>,
    } else {
    }
    %c0 = arith.constant 0 : index
    %c0_1 = arith.constant 0 : index
    %3 = vector.load %arg7[%c0, %c0_1] : memref<16x256xf32, #tpu.memory_space<vmem>>, vector<16x256xf32>
    %c0_2 = arith.constant 0 : index
    %c0_3 = arith.constant 0 : index
    %4 = vector.load %arg3[%c0_2, %c0_3] : memref<16x32xbf16, #tpu.memory_space<vmem>>, vector<16x32xbf16>
    %c0_4 = arith.constant 0 : index
    %c0_5 = arith.constant 0 : index
    %5 = vector.load %arg4[%c0_4, %c0_5] : memref<32x256xbf16, #tpu.memory_space<vmem>>, vector<32x256xbf16>
    %cst = arith.constant dense<0.000000e+00> : vector<16x256xf32>
    %6 = tpu.matmul %4, %5, %cst {dimension_numbers = #tpu.dot_dimension_numbers<[1], [0], [0], [1], [0, 0, 1, 1], [], []>} : vector<16x32xbf16>, vector<32x256xbf16>, vector<16x256xf32> -> vector<16x256xf32>
    %7 = arith.addf %3, %6 : vector<16x256xf32>
    %c0_6 = arith.constant 0 : index
    %c0_7 = arith.constant 0 : index
    %8 = vector.load %arg7[%c0_6, %c0_7] : memref<16x256xf32, #tpu.memory_space<vmem>>, vector<16x256xf32>
    tpu.vector_store %arg7[%c0_6, %c0_7], %7 {strides = array<i32>} : memref<16x256xf32, #tpu.memory_space<vmem>>, vector<16x256xf32>,
    %c0_i32_8 = arith.constant 0 : i32
    %9 = arith.cmpi eq, %arg2, %c0_i32_8 : i32
    %10 = arith.extui %9 : i1 to i32
    %c0_i32_9 = arith.constant 0 : i32
    %11 = arith.cmpi ne, %10, %c0_i32_9 : i32
    scf.if %11 {
      %c0_10 = arith.constant 0 : index
      %c0_11 = arith.constant 0 : index
      %12 = vector.load %arg7[%c0_10, %c0_11] : memref<16x256xf32, #tpu.memory_space<vmem>>, vector<16x256xf32>
      %c0_12 = arith.constant 0 : index
      %c0_13 = arith.constant 0 : index
      %13 = vector.load %arg5[%c0_12, %c0_13] : memref<1x256xf32, #tpu.memory_space<vmem>>, vector<1x256xf32>
      %14 = vector.broadcast %13 : vector<1x256xf32> to vector<16x256xf32>
      %15 = arith.addf %12, %14 : vector<16x256xf32>
      %c0_14 = arith.constant 0 : index
      %c0_15 = arith.constant 0 : index
      %16 = vector.load %arg6[%c0_14, %c0_15] : memref<16x256xf32, #tpu.memory_space<vmem>>, vector<16x256xf32>
      tpu.vector_store %arg6[%c0_14, %c0_15], %15 {strides = array<i32>} : memref<16x256xf32, #tpu.memory_space<vmem>>, vector<16x256xf32>,
    } else {
    }
    return
  }
  func.func @transform_0(%arg0: i32, %arg1: i32, %arg2: i32) -> (i32, i32) {
    %c0_i32 = arith.constant 0 : i32
    return %arg0, %arg2 : i32, i32
  }
  func.func @transform_1(%arg0: i32, %arg1: i32, %arg2: i32) -> (i32, i32) {
    %c0_i32 = arith.constant 0 : i32
    return %arg2, %arg1 : i32, i32
  }
  func.func @transform_2(%arg0: i32, %arg1: i32, %arg2: i32) -> (i32, i32) {
    %c0_i32 = arith.constant 0 : i32
    %c0_i32_0 = arith.constant 0 : i32
    return %c0_i32, %arg1 : i32, i32
  }
  func.func @transform_3(%arg0: i32, %arg1: i32, %arg2: i32) -> (i32, i32) {
    %c0_i32 = arith.constant 0 : i32
    return %arg0, %arg1 : i32, i32
  }
}

</mosaic_0001>

<llo_original>
// kernel: tpu_custom_call.1
$region0: #{tpu_custom_call.1}
  #allocation0 [shape = 'u32[]', space=smem, size = 0x4, offset = 0x4, fixed_abs, tag = 'smem constant byte address 0x4 - core index']
  #allocation1 [shape = 'u32[144,128]{1,0:T(1,128)}', space=vmem, size = 0x12000, scoped, tag = 'internal scratch']
  #allocation2 [shape = 'f32[16,256]{1,0:T(8,128)}', space=vmem, size = 0x4000, scoped, tag = 'scratch operand']
  %s0 = inlined_call_operand.hbm [shape: bf16[16,32], index: 0, kind: input, shape index: {}]
  %s1 = inlined_call_operand.hbm [shape: bf16[32,256], index: 1, kind: input, shape index: {}]
  %s2 = inlined_call_operand.vmem [shape: f32[1,256], index: 2, kind: input, shape index: {}]
  %s3 = inlined_call_operand.hbm [shape: f32[16,256], index: 3, kind: output, shape index: {}]
  %s4 = sld [smem:[#allocation0]]
  $region38: #{tpu_custom_call.1} parent=0
    _
  %s6 = ssub.s32 1, %s4
  %s7 = scalar_select 0, %s6, %s4
  $region1: #{tpu_custom_call.1} parent=0
    #allocation3 [shape = 'u8[4096]{0}', space=vmem, size = 0x1000, scoped, tag = 'input window, operand 0, single buffered']
    #allocation4 [shape = 's32[1]{0}', space=sflag, size = 0x4, scoped, tag = 'scoped memory for tpu_custom_call.1']
    #allocation5 [shape = 's32[1]{0}', space=sflag, size = 0x4, scoped, tag = 'scoped memory for tpu_custom_call.1']
    #allocation6 [shape = 'u8[16384]{0}', space=vmem, size = 0x4000, scoped, tag = 'input window, operand 1, single buffered']
    #allocation7 [shape = 's32[1]{0}', space=sflag, size = 0x4, scoped, tag = 'scoped memory for tpu_custom_call.1']
    #allocation8 [shape = 'u8[16384]{0}', space=vmem, size = 0x4000, scoped, tag = 'output window, operand 0, single buffered']
    %8 = vsyncpa [#allocation4], 0
    %9 = vsyncpa [#allocation7], 0
    %10 = vsyncpa [#allocation5], 0
    // Predicated region
    $region2: #{tpu_custom_call.1} parent=1 // pred_check
      _
    $region3: #{tpu_custom_call.1} parent=1 // pred_check_branch
      %12 = sbr.rel (0) target = $region5
    $region4: #{tpu_custom_call.1} parent=1 // pred_region
      %s14 = ssub.s32 128, 128
      %15 = vsyncadd [#allocation4], %s14
      %s16 = sshll.u32 [#allocation3], 4
      %s17 = int_to_ptr.vmem [resolvable:$true] %s16
      %22 = dma.hbm_to_vmem [thread:$0]  %s0, 128, %s17, [#allocation4], 64, 64, 4
    $region5: #{tpu_custom_call.1} parent=1 // pred_fallthru
      _
    // Predicated region
    $region6: #{tpu_custom_call.1} parent=1 // pred_check
      _
    $region7: #{tpu_custom_call.1} parent=1 // pred_check_branch
      %24 = sbr.rel (0) target = $region9
    $region8: #{tpu_custom_call.1} parent=1 // pred_region
      %s26 = ssub.s32 512, 512
      %27 = vsyncadd [#allocation7], %s26
      %s28 = sshll.u32 [#allocation6], 4
      %s29 = int_to_ptr.vmem [resolvable:$true] %s28
      %34 = dma.hbm_to_vmem [thread:$0]  %s1, 512, %s29, [#allocation7], 128, 128, 8
    $region9: #{tpu_custom_call.1} parent=1 // pred_fallthru
      _
    // Predicated region
    $region10: #{tpu_custom_call.1} parent=1 // pred_check
      _
    $region11: #{tpu_custom_call.1} parent=1 // pred_check_branch
      %36 = sbr.rel (0) target = $region13
    $region12: #{tpu_custom_call.1} parent=1 // pred_region
      _
    $region13: #{tpu_custom_call.1} parent=1 // pred_fallthru
      _
    // Predicated region
    $region14: #{tpu_custom_call.1} parent=1 // pred_check
      _
    $region15: #{tpu_custom_call.1} parent=1 // pred_check_branch
      %38 = sbr.rel (0) target = $region17
    $region16: #{tpu_custom_call.1} parent=1 // pred_region
      %39 = dma.done [#allocation4], 128
    $region17: #{tpu_custom_call.1} parent=1 // pred_fallthru
      _
    // Predicated region
    $region18: #{tpu_custom_call.1} parent=1 // pred_check
      _
    $region19: #{tpu_custom_call.1} parent=1 // pred_check_branch
      %41 = sbr.rel (0) target = $region21
    $region20: #{tpu_custom_call.1} parent=1 // pred_region
      %42 = dma.done [#allocation7], 512
    $region21: #{tpu_custom_call.1} parent=1 // pred_fallthru
      _
    %p44 = scmp.eq.s32.totalorder 0, 0
    // Predicated region
    $region22: #{tpu_custom_call.1} parent=1 // pred_check
      %p45 = pneg %p44
    $region23: #{tpu_custom_call.1} parent=1 // pred_check_branch
      %47 = sbr.rel (%p45) target = $region25
    $region24: #{tpu_custom_call.1} parent=1 // pred_region
      %48 = vst [vmem:[#allocation2] sm:$0xff] 0.0
      %49 = vst [vmem:[#allocation2 + $0x8] sm:$0xff] 0.0
      %50 = vst [vmem:[#allocation2 + $0x10] sm:$0xff] 0.0
      %51 = vst [vmem:[#allocation2 + $0x18] sm:$0xff] 0.0
    $region25: #{tpu_custom_call.1} parent=1 // pred_fallthru
      _
    %v52 = vld [vmem:[#allocation2] sm:$0xff]
    %v53 = vld [vmem:[#allocation2 + $0x8] sm:$0xff]
    %v54 = vld [vmem:[#allocation2 + $0x10] sm:$0xff]
    %v55 = vld [vmem:[#allocation2 + $0x18] sm:$0xff]
    %v56 = vld [vmem:[#allocation3] sm:$0xf]
    %v57 = vld [vmem:[#allocation3 + $0x4] sm:$0xf]
    %v58 = vld [vmem:[#allocation6] sm:$0xff]
    %v59 = vld [vmem:[#allocation6 + $0x8] sm:$0xff]
    %v60 = vld [vmem:[#allocation6 + $0x10] sm:$0xff]
    %v61 = vld [vmem:[#allocation6 + $0x18] sm:$0xff]
    %v64 = vunpack.c.l.b16 %v56
    %v65 = vunpack.c.l.b16 %v57
    %v66 = vpack.c.b16 %v65, %v64
    %v71 = vunpack.c.l.b16 %v58
    %v72 = vunpack.c.h.b16 %v58
    %v73 = vunpack.c.l.b16 %v59
    %v74 = vunpack.c.h.b16 %v59
    %v75 = vunpack.c.l.b16 %v60
    %v76 = vunpack.c.h.b16 %v60
    %v77 = vunpack.c.l.b16 %v61
    %v78 = vunpack.c.h.b16 %v61
    %v79 = vpack.c.b16 %v73, %v71
    %v80 = vpack.c.b16 %v74, %v72
    %v81 = vpack.c.b16 %v77, %v75
    %v82 = vpack.c.b16 %v78, %v76
    %vm87 = vcmask 261120
    %v89 = vsel %vm87, %v66, 0
    %91 = vmatprep.subr.bf16.mxu0 0
    %92 = vmatpush1.bf16.msra.mxu0 0
    %93 = vmatprep.subr.bf16.mxu0 0
    %94 = vmatpush1.bf16.msra.mxu0 0
    %95 = vmatprep.subr.bf16.mxu0 0
    %96 = vmatpush1.bf16.msra.mxu0 0
    %97 = vmatprep.subr.bf16.mxu0 0
    %98 = vmatpush1.bf16.msra.mxu0 0
    %99 = vmatprep.subr.bf16.mxu0 0
    %100 = vmatpush1.bf16.msra.mxu0 0
    %101 = vmatprep.subr.bf16.mxu0 0
    %102 = vmatpush1.bf16.msra.mxu0 0
    %103 = vmatprep.subr.bf16.mxu0 %v82
    %104 = vmatpush1.bf16.msra.mxu0 %v81
    %105 = vmatprep.subr.bf16.mxu0 %v80
    %106 = vmatpush1.bf16.msra.mxu0 %v79
    %107 = vmatprep.subr.bf16.mxu0 0
    %108 = vmatpush2.bf16.msra.mxu0 0
    %109 = vmatprep.subr.bf16.mxu0 0
    %110 = vmatpush2.bf16.msra.mxu0 0
    %111 = vmatprep.subr.bf16.mxu0 0
    %112 = vmatpush2.bf16.msra.mxu0 0
    %113 = vmatprep.subr.bf16.mxu0 0
    %114 = vmatpush2.bf16.msra.mxu0 0
    %115 = vmatprep.subr.bf16.mxu0 0
    %116 = vmatpush2.bf16.msra.mxu0 0
    %117 = vmatprep.subr.bf16.mxu0 0
    %118 = vmatpush2.bf16.msra.mxu0 0
    %119 = vmatprep.subr.bf16.mxu0 0
    %120 = vmatpush2.bf16.msra.mxu0 0
    %121 = vmatprep.subr.bf16.mxu0 0
    %122 = vmatpush2.bf16.msra.mxu0 0
    %123 = vmatprep.mubr.bf16.mxu0 0
    %124 = vmatmul.mubr.bf16.gmra.mxu0 %v89
    %v125 = vpop.f32.mrf.mxu0
    %v126 = vadd.f32 0.0, %v125
    %v127 = vpop.f32.mrf.mxu0
    %v128 = vadd.f32 0.0, %v127
    %v129 = vpop.f32.mrf.mxu0
    %v130 = vadd.f32 0.0, %v129
    %v131 = vpop.f32.mrf.mxu0
    %v132 = vadd.f32 0.0, %v131
    %133 = vdwg.mxu0
    %v134 = vadd.f32 %v52, %v126
    %v135 = vadd.f32 %v53, %v128
    %v136 = vadd.f32 %v54, %v130
    %v137 = vadd.f32 %v55, %v132
    %138 = vst [vmem:[#allocation2] sm:$0xff] %v134
    %139 = vst [vmem:[#allocation2 + $0x8] sm:$0xff] %v135
    %140 = vst [vmem:[#allocation2 + $0x10] sm:$0xff] %v136
    %141 = vst [vmem:[#allocation2 + $0x18] sm:$0xff] %v137
    // Predicated region
    $region26: #{tpu_custom_call.1} parent=1 // pred_check
      %p142 = pneg %p44
    $region27: #{tpu_custom_call.1} parent=1 // pred_check_branch
      %144 = sbr.rel (%p142) target = $region29
    $region28: #{tpu_custom_call.1} parent=1 // pred_region
      %v145 = vld [vmem:[#allocation2] sm:$0xff]
      %v146 = vld [vmem:[#allocation2 + $0x8] sm:$0xff]
      %v147 = vld [vmem:[#allocation2 + $0x10] sm:$0xff]
      %v148 = vld [vmem:[#allocation2 + $0x18] sm:$0xff]
      %v149 = vld [vmem:[%s2] sm:$0x3]
      %v151 = vlaneseq
      %v152 = vshrl.u32 %v151, 7
      %v153 = vsub.s32 0, %v152
      %v154 = vrot.slane %v149, %v153
      %v155 = vlaneseq
      %v156 = vshrl.u32 %v155, 7
      %v157 = vsub.s32 1, %v156
      %v158 = vrot.slane %v149, %v157
      %v161 = vadd.f32 %v145, %v154
      %v162 = vadd.f32 %v146, %v158
      %v163 = vadd.f32 %v147, %v154
      %v164 = vadd.f32 %v148, %v158
      %165 = vst [vmem:[#allocation8] sm:$0xff] %v161
      %166 = vst [vmem:[#allocation8 + $0x8] sm:$0xff] %v162
      %167 = vst [vmem:[#allocation8 + $0x10] sm:$0xff] %v163
      %168 = vst [vmem:[#allocation8 + $0x18] sm:$0xff] %v164
    $region29: #{tpu_custom_call.1} parent=1 // pred_fallthru
      _
    // Predicated region
    $region30: #{tpu_custom_call.1} parent=1 // pred_check
      _
    $region31: #{tpu_custom_call.1} parent=1 // pred_check_branch
      %170 = sbr.rel (0) target = $region33
    $region32: #{tpu_custom_call.1} parent=1 // pred_region
      %s172 = ssub.s32 512, 512
      %173 = vsyncadd [#allocation5], %s172
      %s174 = sshll.u32 [#allocation8], 4
      %s175 = int_to_ptr.vmem [resolvable:$true] %s174
      %180 = dma.vmem_to_hbm [thread:$0]  %s175, 512, %s3, [#allocation5], 256, 256, 16
    $region33: #{tpu_custom_call.1} parent=1 // pred_fallthru
      _
    // Predicated region
    $region34: #{tpu_custom_call.1} parent=1 // pred_check
      _
    $region35: #{tpu_custom_call.1} parent=1 // pred_check_branch
      %182 = sbr.rel (0) target = $region37
    $region36: #{tpu_custom_call.1} parent=1 // pred_region
      %183 = dma.done [#allocation5], 512
    $region37: #{tpu_custom_call.1} parent=1 // pred_fallthru
      _
    %184 = vsyncpa [#allocation4], 1
    %185 = vsyncpa [#allocation7], 1
    %186 = vsyncpa [#allocation5], 1

</llo_original>
